<compile_context>
chip_gen: v7x
topology: tpu7x:2x2x1
jax: 0.10.0
libtpu: 0.0.40
codegen_flags: <defaults>
</compile_context>

<pallas_src>
import functools

import jax
import jax.numpy as jnp
import numpy as np
from jax.experimental import pallas as pl
from jax.experimental.pallas import tpu as pltpu


# ----------------------------------------------------------------------------
# Fused kernel: encoder + head + confidence gate + (folded) fused head
# ----------------------------------------------------------------------------
def _fused_main_kernel(x_ref, enc_w_ref, enc_b_ref,
                       hw_cls_ref, hb_cls_ref, hw_reg_ref, hb_reg_ref,
                       psm_ref, rm_ref, comm_ref, *,
                       hw_valid, hw_padded):
    """One (batch, pixel-tile) block of the full forward pass.

    x_ref      : (Cin , T)   input BEV features, pixels on the lane axis
    enc_w_ref  : (Cenc, Cin) encoder 1x1 conv weight   (resident VMEM)
    enc_b_ref  : (Cenc, 1)   encoder bias
    hw_cls_ref : (A   , Cenc) cls head weight          (resident VMEM)
    hb_cls_ref : (A   , 1)    cls head bias
    hw_reg_ref : (7A  , Cenc) reg head weight
    hb_reg_ref : (7A  , 1)    reg head bias
    psm_ref    : (A  , T)    cls output block (lane-dense, bf16)
    rm_ref     : (7A , T)    reg output block (lane-dense, bf16)
    comm_ref   : (1, 128)    per-(batch, tile) confidence partial sum
    """
    x = x_ref[...]                                # (Cin, T) f32
    enc_w = enc_w_ref[...]                        # (Cenc, Cin)
    cin = enc_w.shape[1]
    tile = x.shape[1]

    # encoder: 1x1 conv + ReLU.
    #  * tiny Cin -> unrolled VPU FMAs (keeps the MXU free, avoids push/pop)
    #  * larger Cin (production configs) -> MXU matmul (frees the VALU slots)
    if cin >= 16:
        feat = jnp.dot(enc_w, x, preferred_element_type=jnp.float32)
    else:
        feat = enc_w[:, 0:1] * x[0:1, :]
        for k in range(1, cin):
            feat = feat + enc_w[:, k:k + 1] * x[k:k + 1, :]
    feat = jnp.maximum(feat + enc_b_ref[...], 0.0)             # (Cenc, T)

    # head on the un-fused features (cls / reg split -> no sublane-crossing
    # value slices, both stores stay aligned).
    hb_cls = hb_cls_ref[...]                                    # (A, 1)
    hb_reg = hb_reg_ref[...]                                    # (7A, 1)
    cls_single = jnp.dot(hw_cls_ref[...], feat,
                         preferred_element_type=jnp.float32) + hb_cls
    reg_single = jnp.dot(hw_reg_ref[...], feat,
                         preferred_element_type=jnp.float32) + hb_reg

    # where2comm-style confidence gate (single-agent branch)
    conf = jax.nn.sigmoid(jnp.max(cls_single, axis=0, keepdims=True))  # (1, T)

    # head on the fused features, folded algebraically:
    #   head(feat * conf) = conf * (head(feat) - b) + b
    psm_ref[...] = (conf * (cls_single - hb_cls) + hb_cls).astype(psm_ref.dtype)
    rm_ref[...] = (conf * (reg_single - hb_reg) + hb_reg).astype(rm_ref.dtype)

    # communication rate: per-(batch, tile) partial sum into a private output
    # block (parallel-safe; no shared accumulator).  Padded-lane masking only
    # runs on the last tile (and only when padding exists at all).
    def _store_comm(s):
        comm_ref[...] = jnp.broadcast_to(s, comm_ref.shape).astype(jnp.float32)

    if hw_padded != hw_valid:
        ti = pl.program_id(1)
        last = pl.num_programs(1) - 1

        @pl.when(ti == last)
        def _():
            col = ti * tile + jax.lax.broadcasted_iota(jnp.int32, conf.shape, 1)
            _store_comm(jnp.sum(jnp.where(col < hw_valid, conf, 0.0)))

        @pl.when(ti != last)
        def _():
            _store_comm(jnp.sum(conf))
    else:
        _store_comm(jnp.sum(conf))


# ----------------------------------------------------------------------------
# Wrapper / glue
# ----------------------------------------------------------------------------
def _round_up(v, m):
    return (v + m - 1) // m * m


def _pick_tile(hw, max_tile=4096):
    """Return (tile, padded_hw): large lane-dense tiles, minimal padding.

    * hw fits in one tile            -> single tile, pad only to 128.
    * a >=512 divisor of hw exists   -> use it, no extra padding.
    * otherwise                      -> max_tile, pad hw up to a multiple
                                        (keeps grid steps >= 512 lanes).
    """
    hw128 = _round_up(hw, 128)
    if hw128 <= max_tile:
        return hw128, hw128
    for t in range(max_tile, 511, -128):
        if hw128 % t == 0:
            return t, hw128
    return max_tile, _round_up(hw128, max_tile)


def init_params(key, cin, cenc, anchor_num):
    """Synthetic encoder/head weights (PyTorch conv layout: [Cout, Cin])."""
    k1, k2, k3, k4 = jax.random.split(key, 4)
    head_cout = anchor_num + 7 * anchor_num         # psm (A) + rm (7A)
    return {
        "enc_w": jax.random.normal(k1, (cenc, cin), jnp.float32) * 0.1,
        "enc_b": jax.random.normal(k2, (cenc, 1), jnp.float32) * 0.1,
        "head_w": jax.random.normal(k3, (head_cout, cenc), jnp.float32) * 0.1,
        "head_b": jax.random.normal(k4, (head_cout, 1), jnp.float32) * 0.1,
    }


def main_module_forward(x_nchw, params, *, anchor_num):
    """Mirrors MainModule.forward (neb_middle_info=None branch)."""
    b, cin, h, w = x_nchw.shape
    a = anchor_num
    cenc = params["enc_w"].shape[0]
    hw = h * w

    # NCHW -> (B, C, H*W): free reshape; channels land on sublanes, BEV pixels
    # on the 128-lane axis -> lane-dense loads/stores, no XLA transposes.
    x3 = x_nchw.reshape(b, cin, hw)

    tile_hw, hw_pad = _pick_tile(hw)
    num_tiles = hw_pad // tile_hw
    if hw_pad != hw:
        # TODO(synk): pad W once upstream (data prep) so this HBM round trip
        # disappears; for 128-aligned BEV grids this branch never runs.
        x3 = jnp.pad(x3, ((0, 0), (0, 0), (0, hw_pad - hw)))

    # Split the head into cls / reg halves so the kernel never slices across
    # the sublane tile (tiny one-time XLA ops on the weights only).
    hw_cls, hw_reg = params["head_w"][:a], params["head_w"][a:]
    hb_cls, hb_reg = params["head_b"][:a], params["head_b"][a:]

    kernel = functools.partial(_fused_main_kernel, hw_valid=hw, hw_padded=hw_pad)

    vmem = pl.BlockSpec(memory_space=pltpu.MemorySpace.VMEM)   # resident weights
    out_dtype = jnp.bfloat16                                   # halve writeback

    flops = 2 * b * hw_pad * cenc * (cin + 8 * a)
    bytes_accessed = (b * hw_pad * (cin * 4 + 8 * a * 2)       # x in, psm/rm out
                      + 4 * (cenc * cin + cenc + 8 * a * cenc + 8 * a)
                      + b * num_tiles * 128 * 4)               # comm partials
    cost = pl.CostEstimate(flops=flops, transcendentals=b * hw_pad,
                           bytes_accessed=bytes_accessed)

    psm, rm, comm_parts = pl.pallas_call(
        kernel,
        out_shape=(
            jax.ShapeDtypeStruct((b, a, hw_pad), out_dtype),
            jax.ShapeDtypeStruct((b, 7 * a, hw_pad), out_dtype),
            jax.ShapeDtypeStruct((b, num_tiles, 1, 128), jnp.float32),
        ),
        grid=(b, num_tiles),
        in_specs=[
            pl.BlockSpec((None, cin, tile_hw), lambda bi, ti: (bi, 0, ti)),
            vmem, vmem, vmem, vmem, vmem, vmem,
        ],
        out_specs=(
            pl.BlockSpec((None, a, tile_hw), lambda bi, ti: (bi, 0, ti)),
            pl.BlockSpec((None, 7 * a, tile_hw), lambda bi, ti: (bi, 0, ti)),
            pl.BlockSpec((None, None, 1, 128), lambda bi, ti: (bi, ti, 0, 0)),
        ),
        compiler_params=pltpu.CompilerParams(
            # every (batch, tile) step writes its own output blocks, so both
            # axes are parallel-safe (lets v7x shard across its 2 TensorCores)
            dimension_semantics=("parallel", "parallel"),
            vmem_limit_bytes=32 * 1024 * 1024),
        cost_estimate=cost,
    )(x3, params["enc_w"], params["enc_b"], hw_cls, hb_cls, hw_reg, hb_reg)

    if hw_pad != hw:
        psm = psm[:, :, :hw]
        rm = rm[:, :, :hw]

    comm = jnp.sum(comm_parts[:, :, 0, 0]) / jnp.float32(b * hw)
    return {
        "psm": psm.reshape(b, a, h, w),
        "rm": rm.reshape(b, 7 * a, h, w),
        "com": comm,
    }


# ----------------------------------------------------------------------------
# Pure-JAX reference (un-fused, literal second head conv) for validation
# ----------------------------------------------------------------------------
def _reference_forward(x, params, anchor_num):
    a = anchor_num
    enc_b = params["enc_b"].reshape(1, -1, 1, 1)
    head_b = params["head_b"].reshape(1, -1, 1, 1)
    hp = jax.lax.Precision.HIGHEST
    feat = jnp.maximum(
        jnp.einsum("oc,bchw->bohw", params["enc_w"], x, precision=hp) + enc_b,
        0.0)
    head1 = jnp.einsum("oc,bchw->bohw", params["head_w"], feat,
                       precision=hp) + head_b
    conf = jax.nn.sigmoid(jnp.max(head1[:, :a], axis=1, keepdims=True))
    fused = feat * conf
    head2 = jnp.einsum("oc,bchw->bohw", params["head_w"], fused,
                       precision=hp) + head_b
    return {"psm": head2[:, :a], "rm": head2[:, a:], "com": jnp.mean(conf)}


if __name__ == "__main__":
    # hypes-derived grid: lidar_range=[-32,-32,-3,32,32,1], voxel_size=[4,4,4]
    lidar_range = np.array([-32.0, -32.0, -3.0, 32.0, 32.0, 1.0])
    voxel_size = np.array([4.0, 4.0, 4.0])
    grid_size = np.round(
        (lidar_range[3:6] - lidar_range[0:3]) / voxel_size).astype(np.int64)
    H, W = int(grid_size[1]), int(grid_size[0])      # 16 x 16 BEV grid

    B, Cin, Cenc, ANCHOR = 2, 4, 32, 2

    key = jax.random.PRNGKey(0)
    kx, kp = jax.random.split(key)
    x = jax.random.normal(kx, (B, Cin, H, W), jnp.float32)   # NCHW BEV input
    params = init_params(kp, Cin, Cenc, ANCHOR)

    fwd = jax.jit(functools.partial(main_module_forward, anchor_num=ANCHOR))
    out = fwd(x, params)
    jax.block_until_ready(out)

    assert out["psm"].shape == (B, ANCHOR, H, W)
    assert out["rm"].shape == (B, 7 * ANCHOR, H, W)
    assert out["com"].shape == ()

    ref = _reference_forward(x, params, ANCHOR)
    np.testing.assert_allclose(np.asarray(out["psm"].astype(jnp.float32)),
                               np.asarray(ref["psm"]), rtol=3e-2, atol=3e-2)
    np.testing.assert_allclose(np.asarray(out["rm"].astype(jnp.float32)),
                               np.asarray(ref["rm"]), rtol=3e-2, atol=3e-2)
    np.testing.assert_allclose(np.asarray(out["com"]), np.asarray(ref["com"]),
                               rtol=2e-2, atol=2e-2)
    print("KERNEL_OK")
</pallas_src>

<mosaic_0001>
module attributes {stable_mosaic.version = 11 : i64} {
  func.func @_fused_main_kernel(%arg0: i32, %arg1: i32, %arg2: memref<1x4x256xf32, #tpu.memory_space<vmem>>, %arg3: memref<32x4xf32, #tpu.memory_space<vmem>>, %arg4: memref<32x1xf32, #tpu.memory_space<vmem>>, %arg5: memref<2x32xf32, #tpu.memory_space<vmem>>, %arg6: memref<2x1xf32, #tpu.memory_space<vmem>>, %arg7: memref<14x32xf32, #tpu.memory_space<vmem>>, %arg8: memref<14x1xf32, #tpu.memory_space<vmem>>, %arg9: memref<1x2x256xbf16, #tpu.memory_space<vmem>>, %arg10: memref<1x14x256xbf16, #tpu.memory_space<vmem>>, %arg11: memref<1x1x1x128xf32, #tpu.memory_space<vmem>>) attributes {dimension_semantics = [#tpu.dimension_semantics<parallel>, #tpu.dimension_semantics<parallel>], iteration_bounds = array<i64: 2, 1>, scalar_prefetch = 0 : i64, scratch_operands = 0 : i64, tpu.core_type = #tpu.core_type<tc>, window_params = [{transform_indices = @transform_0, window_bounds = array<i64: 1, 4, 256>}, {pipeline_mode = #tpu.pipeline_mode<synchronous>, transform_indices = @transform_1, window_bounds = array<i64: 32, 4>}, {pipeline_mode = #tpu.pipeline_mode<synchronous>, transform_indices = @transform_2, window_bounds = array<i64: 32, 1>}, {pipeline_mode = #tpu.pipeline_mode<synchronous>, transform_indices = @transform_3, window_bounds = array<i64: 2, 32>}, {pipeline_mode = #tpu.pipeline_mode<synchronous>, transform_indices = @transform_4, window_bounds = array<i64: 2, 1>}, {pipeline_mode = #tpu.pipeline_mode<synchronous>, transform_indices = @transform_5, window_bounds = array<i64: 14, 32>}, {pipeline_mode = #tpu.pipeline_mode<synchronous>, transform_indices = @transform_6, window_bounds = array<i64: 14, 1>}, {transform_indices = @transform_7, window_bounds = array<i64: 1, 2, 256>}, {transform_indices = @transform_8, window_bounds = array<i64: 1, 14, 256>}, {transform_indices = @transform_9, window_bounds = array<i64: 1, 1, 1, 128>}]} {
    %c0 = arith.constant 0 : index
    %c0_0 = arith.constant 0 : index
    %c0_1 = arith.constant 0 : index
    %0 = vector.load %arg2[%c0, %c0_0, %c0_1] : memref<1x4x256xf32, #tpu.memory_space<vmem>>, vector<1x4x256xf32>
    %1 = vector.shape_cast %0 : vector<1x4x256xf32> to vector<4x256xf32>
    %c0_2 = arith.constant 0 : index
    %c0_3 = arith.constant 0 : index
    %2 = vector.load %arg3[%c0_2, %c0_3] : memref<32x4xf32, #tpu.memory_space<vmem>>, vector<32x4xf32>
    %3 = vector.extract_strided_slice %2 {offsets = [0, 0], sizes = [32, 1], strides = [1, 1]} : vector<32x4xf32> to vector<32x1xf32>
    %4 = vector.extract_strided_slice %1 {offsets = [0, 0], sizes = [1, 256], strides = [1, 1]} : vector<4x256xf32> to vector<1x256xf32>
    %5 = vector.broadcast %3 : vector<32x1xf32> to vector<32x256xf32>
    %6 = vector.broadcast %4 : vector<1x256xf32> to vector<32x256xf32>
    %7 = arith.mulf %5, %6 : vector<32x256xf32>
    %8 = vector.extract_strided_slice %2 {offsets = [0, 1], sizes = [32, 1], strides = [1, 1]} : vector<32x4xf32> to vector<32x1xf32>
    %9 = vector.extract_strided_slice %1 {offsets = [1, 0], sizes = [1, 256], strides = [1, 1]} : vector<4x256xf32> to vector<1x256xf32>
    %10 = vector.broadcast %8 : vector<32x1xf32> to vector<32x256xf32>
    %11 = vector.broadcast %9 : vector<1x256xf32> to vector<32x256xf32>
    %12 = arith.mulf %10, %11 : vector<32x256xf32>
    %13 = arith.addf %7, %12 : vector<32x256xf32>
    %14 = vector.extract_strided_slice %2 {offsets = [0, 2], sizes = [32, 1], strides = [1, 1]} : vector<32x4xf32> to vector<32x1xf32>
    %15 = vector.extract_strided_slice %1 {offsets = [2, 0], sizes = [1, 256], strides = [1, 1]} : vector<4x256xf32> to vector<1x256xf32>
    %16 = vector.broadcast %14 : vector<32x1xf32> to vector<32x256xf32>
    %17 = vector.broadcast %15 : vector<1x256xf32> to vector<32x256xf32>
    %18 = arith.mulf %16, %17 : vector<32x256xf32>
    %19 = arith.addf %13, %18 : vector<32x256xf32>
    %20 = vector.extract_strided_slice %2 {offsets = [0, 3], sizes = [32, 1], strides = [1, 1]} : vector<32x4xf32> to vector<32x1xf32>
    %21 = vector.extract_strided_slice %1 {offsets = [3, 0], sizes = [1, 256], strides = [1, 1]} : vector<4x256xf32> to vector<1x256xf32>
    %22 = vector.broadcast %20 : vector<32x1xf32> to vector<32x256xf32>
    %23 = vector.broadcast %21 : vector<1x256xf32> to vector<32x256xf32>
    %24 = arith.mulf %22, %23 : vector<32x256xf32>
    %25 = arith.addf %19, %24 : vector<32x256xf32>
    %c0_4 = arith.constant 0 : index
    %c0_5 = arith.constant 0 : index
    %26 = vector.load %arg4[%c0_4, %c0_5] : memref<32x1xf32, #tpu.memory_space<vmem>>, vector<32x1xf32>
    %27 = vector.broadcast %26 : vector<32x1xf32> to vector<32x256xf32>
    %28 = arith.addf %25, %27 : vector<32x256xf32>
    %cst = arith.constant 0.000000e+00 : f32
    %29 = vector.broadcast %cst : f32 to vector<32x256xf32>
    %30 = arith.maximumf %28, %29 : vector<32x256xf32>
    %c0_6 = arith.constant 0 : index
    %c0_7 = arith.constant 0 : index
    %31 = vector.load %arg6[%c0_6, %c0_7] : memref<2x1xf32, #tpu.memory_space<vmem>>, vector<2x1xf32>
    %c0_8 = arith.constant 0 : index
    %c0_9 = arith.constant 0 : index
    %32 = vector.load %arg8[%c0_8, %c0_9] : memref<14x1xf32, #tpu.memory_space<vmem>>, vector<14x1xf32>
    %c0_10 = arith.constant 0 : index
    %c0_11 = arith.constant 0 : index
    %33 = vector.load %arg5[%c0_10, %c0_11] : memref<2x32xf32, #tpu.memory_space<vmem>>, vector<2x32xf32>
    %cst_12 = arith.constant dense<0.000000e+00> : vector<2x256xf32>
    %34 = tpu.matmul %33, %30, %cst_12 {dimension_numbers = #tpu.dot_dimension_numbers<[1], [0], [0], [1], [0, 0, 1, 1], [], []>} : vector<2x32xf32>, vector<32x256xf32>, vector<2x256xf32> -> vector<2x256xf32>
    %35 = vector.broadcast %31 : vector<2x1xf32> to vector<2x256xf32>
    %36 = arith.addf %34, %35 : vector<2x256xf32>
    %c0_13 = arith.constant 0 : index
    %c0_14 = arith.constant 0 : index
    %37 = vector.load %arg7[%c0_13, %c0_14] : memref<14x32xf32, #tpu.memory_space<vmem>>, vector<14x32xf32>
    %cst_15 = arith.constant dense<0.000000e+00> : vector<14x256xf32>
    %38 = tpu.matmul %37, %30, %cst_15 {dimension_numbers = #tpu.dot_dimension_numbers<[1], [0], [0], [1], [0, 0, 1, 1], [], []>} : vector<14x32xf32>, vector<32x256xf32>, vector<14x256xf32> -> vector<14x256xf32>
    %39 = vector.broadcast %32 : vector<14x1xf32> to vector<14x256xf32>
    %40 = arith.addf %38, %39 : vector<14x256xf32>
    %cst_16 = arith.constant dense<0xFF800000> : vector<256xf32>
    %41 = vector.multi_reduction <maximumf>, %36, %cst_16 [0] : vector<2x256xf32> to vector<256xf32>
    %42 = vector.shape_cast %41 : vector<256xf32> to vector<1x256xf32>
    %43 = arith.negf %42 : vector<1x256xf32>
    %44 = math.exp %43 : vector<1x256xf32>
    %cst_17 = arith.constant 1.000000e+00 : f32
    %45 = vector.broadcast %cst_17 : f32 to vector<1x256xf32>
    %46 = arith.addf %45, %44 : vector<1x256xf32>
    %47 = arith.divf %45, %46 : vector<1x256xf32>
    %48 = vector.broadcast %31 : vector<2x1xf32> to vector<2x256xf32>
    %49 = arith.subf %36, %48 : vector<2x256xf32>
    %50 = vector.broadcast %47 : vector<1x256xf32> to vector<2x256xf32>
    %51 = arith.mulf %50, %49 : vector<2x256xf32>
    %52 = vector.broadcast %31 : vector<2x1xf32> to vector<2x256xf32>
    %53 = arith.addf %51, %52 : vector<2x256xf32>
    %54 = arith.truncf %53 : vector<2x256xf32> to vector<2x256xbf16>
    %c0_18 = arith.constant 0 : index
    %c0_19 = arith.constant 0 : index
    %c0_20 = arith.constant 0 : index
    %55 = vector.load %arg9[%c0_18, %c0_19, %c0_20] : memref<1x2x256xbf16, #tpu.memory_space<vmem>>, vector<1x2x256xbf16>
    %56 = vector.shape_cast %55 : vector<1x2x256xbf16> to vector<2x256xbf16>
    %57 = vector.shape_cast %54 : vector<2x256xbf16> to vector<1x2x256xbf16>
    tpu.vector_store %arg9[%c0_18, %c0_19, %c0_20], %57 {strides = array<i32>} : memref<1x2x256xbf16, #tpu.memory_space<vmem>>, vector<1x2x256xbf16>,
    %58 = vector.broadcast %32 : vector<14x1xf32> to vector<14x256xf32>
    %59 = arith.subf %40, %58 : vector<14x256xf32>
    %60 = vector.broadcast %47 : vector<1x256xf32> to vector<14x256xf32>
    %61 = arith.mulf %60, %59 : vector<14x256xf32>
    %62 = vector.broadcast %32 : vector<14x1xf32> to vector<14x256xf32>
    %63 = arith.addf %61, %62 : vector<14x256xf32>
    %64 = arith.truncf %63 : vector<14x256xf32> to vector<14x256xbf16>
    %c0_21 = arith.constant 0 : index
    %c0_22 = arith.constant 0 : index
    %c0_23 = arith.constant 0 : index
    %65 = vector.load %arg10[%c0_21, %c0_22, %c0_23] : memref<1x14x256xbf16, #tpu.memory_space<vmem>>, vector<1x14x256xbf16>
    %66 = vector.shape_cast %65 : vector<1x14x256xbf16> to vector<14x256xbf16>
    %67 = vector.shape_cast %64 : vector<14x256xbf16> to vector<1x14x256xbf16>
    tpu.vector_store %arg10[%c0_21, %c0_22, %c0_23], %67 {strides = array<i32>} : memref<1x14x256xbf16, #tpu.memory_space<vmem>>, vector<1x14x256xbf16>,
    %68 = vector.shape_cast %47 : vector<1x256xf32> to vector<1x1x256xf32>
    %cst_24 = arith.constant dense<0.000000e+00> : vector<1xf32>
    %69 = vector.multi_reduction <add>, %68, %cst_24 [1, 2] : vector<1x1x256xf32> to vector<1xf32>
    %70 = vector.shape_cast %69 : vector<1xf32> to vector<1x1x1xf32>
    %71 = vector.extract %70[0, 0, 0] : f32 from vector<1x1x1xf32>
    %72 = vector.broadcast %71 : f32 to vector<1x128xf32>
    %c0_25 = arith.constant 0 : index
    %c0_26 = arith.constant 0 : index
    %c0_27 = arith.constant 0 : index
    %c0_28 = arith.constant 0 : index
    %73 = vector.load %arg11[%c0_25, %c0_26, %c0_27, %c0_28] : memref<1x1x1x128xf32, #tpu.memory_space<vmem>>, vector<1x1x1x128xf32>
    %74 = vector.shape_cast %73 : vector<1x1x1x128xf32> to vector<1x128xf32>
    %75 = vector.shape_cast %72 : vector<1x128xf32> to vector<1x1x1x128xf32>
    tpu.vector_store %arg11[%c0_25, %c0_26, %c0_27, %c0_28], %75 {strides = array<i32>} : memref<1x1x1x128xf32, #tpu.memory_space<vmem>>, vector<1x1x1x128xf32>,
    return
  }
  func.func @transform_0(%arg0: i32, %arg1: i32) -> (i32, i32, i32) {
    %c0_i32 = arith.constant 0 : i32
    %c0_i32_0 = arith.constant 0 : i32
    return %arg0, %c0_i32, %arg1 : i32, i32, i32
  }
  func.func @transform_1(%arg0: i32, %arg1: i32) -> (i32, i32) {
    %c0_i32 = arith.constant 0 : i32
    %c0_i32_0 = arith.constant 0 : i32
    %c0_i32_1 = arith.constant 0 : i32
    return %c0_i32, %c0_i32_0 : i32, i32
  }
  func.func @transform_2(%arg0: i32, %arg1: i32) -> (i32, i32) {
    %c0_i32 = arith.constant 0 : i32
    %c0_i32_0 = arith.constant 0 : i32
    %c0_i32_1 = arith.constant 0 : i32
    return %c0_i32, %c0_i32_0 : i32, i32
  }
  func.func @transform_3(%arg0: i32, %arg1: i32) -> (i32, i32) {
    %c0_i32 = arith.constant 0 : i32
    %c0_i32_0 = arith.constant 0 : i32
    %c0_i32_1 = arith.constant 0 : i32
    return %c0_i32, %c0_i32_0 : i32, i32
  }
  func.func @transform_4(%arg0: i32, %arg1: i32) -> (i32, i32) {
    %c0_i32 = arith.constant 0 : i32
    %c0_i32_0 = arith.constant 0 : i32
    %c0_i32_1 = arith.constant 0 : i32
    return %c0_i32, %c0_i32_0 : i32, i32
  }
  func.func @transform_5(%arg0: i32, %arg1: i32) -> (i32, i32) {
    %c0_i32 = arith.constant 0 : i32
    %c0_i32_0 = arith.constant 0 : i32
    %c0_i32_1 = arith.constant 0 : i32
    return %c0_i32, %c0_i32_0 : i32, i32
  }
  func.func @transform_6(%arg0: i32, %arg1: i32) -> (i32, i32) {
    %c0_i32 = arith.constant 0 : i32
    %c0_i32_0 = arith.constant 0 : i32
    %c0_i32_1 = arith.constant 0 : i32
    return %c0_i32, %c0_i32_0 : i32, i32
  }
  func.func @transform_7(%arg0: i32, %arg1: i32) -> (i32, i32, i32) {
    %c0_i32 = arith.constant 0 : i32
    %c0_i32_0 = arith.constant 0 : i32
    return %arg0, %c0_i32, %arg1 : i32, i32, i32
  }
  func.func @transform_8(%arg0: i32, %arg1: i32) -> (i32, i32, i32) {
    %c0_i32 = arith.constant 0 : i32
    %c0_i32_0 = arith.constant 0 : i32
    return %arg0, %c0_i32, %arg1 : i32, i32, i32
  }
  func.func @transform_9(%arg0: i32, %arg1: i32) -> (i32, i32, i32, i32) {
    %c0_i32 = arith.constant 0 : i32
    %c0_i32_0 = arith.constant 0 : i32
    %c0_i32_1 = arith.constant 0 : i32
    return %arg0, %arg1, %c0_i32, %c0_i32_0 : i32, i32, i32, i32
  }
}

</mosaic_0001>

<llo_original>
// kernel: main_module_forward.1
$region0: #{main_module_forward.1}
  #allocation0 [shape = 'u32[]', space=smem, size = 0x4, offset = 0x4, fixed_abs, tag = 'smem constant byte address 0x4 - core index']
  #allocation1 [shape = 'u32[144,128]{1,0:T(1,128)}', space=vmem, size = 0x12000, scoped, tag = 'internal scratch']
  %s0 = inlined_call_operand.vmem [shape: f32[2,4,256], index: 0, kind: input, shape index: {}]
  %s1 = inlined_call_operand.vmem [shape: f32[32,4], index: 1, kind: input, shape index: {}]
  %s2 = inlined_call_operand.vmem [shape: f32[32,1], index: 2, kind: input, shape index: {}]
  %s3 = inlined_call_operand.vmem [shape: f32[2,32], index: 3, kind: input, shape index: {}]
  %s4 = inlined_call_operand.vmem [shape: f32[2,1], index: 4, kind: input, shape index: {}]
  %s5 = inlined_call_operand.vmem [shape: f32[14,32], index: 5, kind: input, shape index: {}]
  %s6 = inlined_call_operand.vmem [shape: f32[14,1], index: 6, kind: input, shape index: {}]
  %s7 = inlined_call_operand.vmem [shape: bf16[2,2,256], index: 7, kind: output, shape index: {0}]
  %s8 = inlined_call_operand.vmem [shape: bf16[2,14,256], index: 8, kind: output, shape index: {1}]
  %s9 = inlined_call_operand.vmem [shape: f32[2,1,1,128], index: 9, kind: output, shape index: {2}]
  %10 = xla_tuple %s7, %s8, %s9
  %s11 = sld [smem:[#allocation0]]
  $region77: #{main_module_forward.1} parent=0
    _
  %s13 = ssub.s32 1, %s11
  %s14 = scalar_select 0, %s13, %s11
  loop: start=0, step=1, limit=4
  $region2: #{main_module_forward.1} parent=0 // loop_pre_header
    _
  $region3: #{main_module_forward.1} parent=0 // loop_header
    %s16 = sphi 0, %s20
    %p17 = scmp.ge.s32.totalorder %s16, 4
    %s23 = sphi 0, %s35
    %s24 = sphi 0, %s31
    %s25 = sphi 0, %s23
    %s26 = sphi 0, %s24
    %s27 = sphi 0, %s25
    %s28 = sphi 0, %s26
    %s40 = sphi 0, %s42
    %s43 = sphi 0, %s40
    %s44 = sphi 0, %s43
    %s60 = sphi 0, %s44
    %s64 = sphi 0, %s64
    %s66 = sphi 0, %s64
    %s67 = sphi 0, %s66
    %s81 = sphi 0, %s67
    %s85 = sphi 0, %s85
    %s87 = sphi 0, %s85
    %s88 = sphi 0, %s87
    %s102 = sphi 0, %s88
    %s106 = sphi 0, %s106
    %s108 = sphi 0, %s106
    %s109 = sphi 0, %s108
    %s123 = sphi 0, %s109
    %s127 = sphi 0, %s127
    %s129 = sphi 0, %s127
    %s130 = sphi 0, %s129
    %s144 = sphi 0, %s130
    %s148 = sphi 0, %s148
    %s150 = sphi 0, %s148
    %s151 = sphi 0, %s150
    %s165 = sphi 0, %s151
    %s169 = sphi 0, %s169
    %s171 = sphi 0, %s169
    %s172 = sphi 0, %s171
    %s186 = sphi 0, %s172
    %s194 = sphi 0, %s196
    %s197 = sphi 0, %s194
    %s198 = sphi 0, %s197
    %s214 = sphi 0, %s198
    %s222 = sphi 0, %s224
    %s225 = sphi 0, %s222
    %s226 = sphi 0, %s225
    %s242 = sphi 0, %s226
    %s250 = sphi 0, %s252
    %s253 = sphi 0, %s250
    %s254 = sphi 0, %s253
    %s270 = sphi 0, %s254
  $region4: #{main_module_forward.1} parent=0 // loop_header_branch
    %19 = sbr.rel (%p17) target = $region8
  $region5: #{main_module_forward.1} parent=0 // loop_body
    %s21 = ssub.s32 %s16, 1
    %s22 = ssub.s32 %s16, 2
    %s29 = sadd.s32 1, %s24
    %p30 = scmp.ge.s32.totalorder %s29, 1
    %s31 = scalar_select %p30, 0, %s29
    %s32 = sadd.s32 1, %s23
    %s33 = scalar_select %p30, %s32, %s23
    %p34 = scmp.ge.s32.totalorder %s33, 2
    %s35 = scalar_select %p34, 0, %s33
    %s36 = ssub.s32 %s23, %s35
    %s37 = ssub.s32 %s24, %s31
    %s38 = sor.u32 %s36, %s37
    %p39 = scmp.eq.s32.totalorder %s38, 0
    %s41 = sadd.s32 %s40, 1
    %s42 = scalar_select %p39, %s40, %s41
    %p45 = pneg %p39
    %p46 = scmp.eq.s32.totalorder %s16, 1
    %p47 = por %p45, %p46
    %p48 = scmp.ne.s32.totalorder %s40, %s43
    %p49 = scmp.eq.s32.totalorder %s16, 0
    %p50 = por %p48, %p49
    %p51 = scmp.ne.s32.totalorder %s40, %s43
    %p52 = scmp.eq.s32.totalorder %s21, 1
    %p53 = por %p51, %p52
    %p54 = scmp.ne.s32.totalorder %s43, %s44
    %p55 = scmp.eq.s32.totalorder %s21, 0
    %p56 = por %p54, %p55
    %p57 = scmp.ne.s32.totalorder %s43, %s44
    %p58 = scmp.eq.s32.totalorder %s22, 1
    %p59 = por %p57, %p58
    %p61 = scmp.ne.s32.totalorder %s44, %s60
    %p62 = scmp.eq.s32.totalorder %s22, 0
    %p63 = por %p61, %p62
    %s65 = sadd.s32 %s64, 1
    %p68 = scmp.eq.s32.totalorder %s16, 1
    %p69 = scmp.ne.s32.totalorder %s64, %s66
    %p70 = scmp.eq.s32.totalorder %s16, 0
    %p71 = por %p69, %p70
    %p72 = scmp.ne.s32.totalorder %s64, %s66
    %p73 = scmp.eq.s32.totalorder %s21, 1
    %p74 = por %p72, %p73
    %p75 = scmp.ne.s32.totalorder %s66, %s67
    %p76 = scmp.eq.s32.totalorder %s21, 0
    %p77 = por %p75, %p76
    %p78 = scmp.ne.s32.totalorder %s66, %s67
    %p79 = scmp.eq.s32.totalorder %s22, 1
    %p80 = por %p78, %p79
    %p82 = scmp.ne.s32.totalorder %s67, %s81
    %p83 = scmp.eq.s32.totalorder %s22, 0
    %p84 = por %p82, %p83
    %s86 = sadd.s32 %s85, 1
    %p89 = scmp.eq.s32.totalorder %s16, 1
    %p90 = scmp.ne.s32.totalorder %s85, %s87
    %p91 = scmp.eq.s32.totalorder %s16, 0
    %p92 = por %p90, %p91
    %p93 = scmp.ne.s32.totalorder %s85, %s87
    %p94 = scmp.eq.s32.totalorder %s21, 1
    %p95 = por %p93, %p94
    %p96 = scmp.ne.s32.totalorder %s87, %s88
    %p97 = scmp.eq.s32.totalorder %s21, 0
    %p98 = por %p96, %p97
    %p99 = scmp.ne.s32.totalorder %s87, %s88
    %p100 = scmp.eq.s32.totalorder %s22, 1
    %p101 = por %p99, %p100
    %p103 = scmp.ne.s32.totalorder %s88, %s102
    %p104 = scmp.eq.s32.totalorder %s22, 0
    %p105 = por %p103, %p104
    %s107 = sadd.s32 %s106, 1
    %p110 = scmp.eq.s32.totalorder %s16, 1
    %p111 = scmp.ne.s32.totalorder %s106, %s108
    %p112 = scmp.eq.s32.totalorder %s16, 0
    %p113 = por %p111, %p112
    %p114 = scmp.ne.s32.totalorder %s106, %s108
    %p115 = scmp.eq.s32.totalorder %s21, 1
    %p116 = por %p114, %p115
    %p117 = scmp.ne.s32.totalorder %s108, %s109
    %p118 = scmp.eq.s32.totalorder %s21, 0
    %p119 = por %p117, %p118
    %p120 = scmp.ne.s32.totalorder %s108, %s109
    %p121 = scmp.eq.s32.totalorder %s22, 1
    %p122 = por %p120, %p121
    %p124 = scmp.ne.s32.totalorder %s109, %s123
    %p125 = scmp.eq.s32.totalorder %s22, 0
    %p126 = por %p124, %p125
    %s128 = sadd.s32 %s127, 1
    %p131 = scmp.eq.s32.totalorder %s16, 1
    %p132 = scmp.ne.s32.totalorder %s127, %s129
    %p133 = scmp.eq.s32.totalorder %s16, 0
    %p134 = por %p132, %p133
    %p135 = scmp.ne.s32.totalorder %s127, %s129
    %p136 = scmp.eq.s32.totalorder %s21, 1
    %p137 = por %p135, %p136
    %p138 = scmp.ne.s32.totalorder %s129, %s130
    %p139 = scmp.eq.s32.totalorder %s21, 0
    %p140 = por %p138, %p139
    %p141 = scmp.ne.s32.totalorder %s129, %s130
    %p142 = scmp.eq.s32.totalorder %s22, 1
    %p143 = por %p141, %p142
    %p145 = scmp.ne.s32.totalorder %s130, %s144
    %p146 = scmp.eq.s32.totalorder %s22, 0
    %p147 = por %p145, %p146
    %s149 = sadd.s32 %s148, 1
    %p152 = scmp.eq.s32.totalorder %s16, 1
    %p153 = scmp.ne.s32.totalorder %s148, %s150
    %p154 = scmp.eq.s32.totalorder %s16, 0
    %p155 = por %p153, %p154
    %p156 = scmp.ne.s32.totalorder %s148, %s150
    %p157 = scmp.eq.s32.totalorder %s21, 1
    %p158 = por %p156, %p157
    %p159 = scmp.ne.s32.totalorder %s150, %s151
    %p160 = scmp.eq.s32.totalorder %s21, 0
    %p161 = por %p159, %p160
    %p162 = scmp.ne.s32.totalorder %s150, %s151
    %p163 = scmp.eq.s32.totalorder %s22, 1
    %p164 = por %p162, %p163
    %p166 = scmp.ne.s32.totalorder %s151, %s165
    %p167 = scmp.eq.s32.totalorder %s22, 0
    %p168 = por %p166, %p167
    %s170 = sadd.s32 %s169, 1
    %p173 = scmp.eq.s32.totalorder %s16, 1
    %p174 = scmp.ne.s32.totalorder %s169, %s171
    %p175 = scmp.eq.s32.totalorder %s16, 0
    %p176 = por %p174, %p175
    %p177 = scmp.ne.s32.totalorder %s169, %s171
    %p178 = scmp.eq.s32.totalorder %s21, 1
    %p179 = por %p177, %p178
    %p180 = scmp.ne.s32.totalorder %s171, %s172
    %p181 = scmp.eq.s32.totalorder %s21, 0
    %p182 = por %p180, %p181
    %p183 = scmp.ne.s32.totalorder %s171, %s172
    %p184 = scmp.eq.s32.totalorder %s22, 1
    %p185 = por %p183, %p184
    %p187 = scmp.ne.s32.totalorder %s172, %s186
    %p188 = scmp.eq.s32.totalorder %s22, 0
    %p189 = por %p187, %p188
    %s190 = ssub.s32 %s23, %s35
    %s191 = ssub.s32 %s24, %s31
    %s192 = sor.u32 %s190, %s191
    %p193 = scmp.eq.s32.totalorder %s192, 0
    %s195 = sadd.s32 %s194, 1
    %s196 = scalar_select %p193, %s194, %s195
    %p199 = pneg %p193
    %p200 = scmp.eq.s32.totalorder %s16, 1
    %p201 = por %p199, %p200
    %p202 = scmp.ne.s32.totalorder %s194, %s197
    %p203 = scmp.eq.s32.totalorder %s16, 0
    %p204 = por %p202, %p203
    %p205 = scmp.ne.s32.totalorder %s194, %s197
    %p206 = scmp.eq.s32.totalorder %s21, 1
    %p207 = por %p205, %p206
    %p208 = scmp.ne.s32.totalorder %s197, %s198
    %p209 = scmp.eq.s32.totalorder %s21, 0
    %p210 = por %p208, %p209
    %p211 = scmp.ne.s32.totalorder %s197, %s198
    %p212 = scmp.eq.s32.totalorder %s22, 1
    %p213 = por %p211, %p212
    %p215 = scmp.ne.s32.totalorder %s198, %s214
    %p216 = scmp.eq.s32.totalorder %s22, 0
    %p217 = por %p215, %p216
    %s218 = ssub.s32 %s23, %s35
    %s219 = ssub.s32 %s24, %s31
    %s220 = sor.u32 %s218, %s219
    %p221 = scmp.eq.s32.totalorder %s220, 0
    %s223 = sadd.s32 %s222, 1
    %s224 = scalar_select %p221, %s222, %s223
    %p227 = pneg %p221
    %p228 = scmp.eq.s32.totalorder %s16, 1
    %p229 = por %p227, %p228
    %p230 = scmp.ne.s32.totalorder %s222, %s225
    %p231 = scmp.eq.s32.totalorder %s16, 0
    %p232 = por %p230, %p231
    %p233 = scmp.ne.s32.totalorder %s222, %s225
    %p234 = scmp.eq.s32.totalorder %s21, 1
    %p235 = por %p233, %p234
    %p236 = scmp.ne.s32.totalorder %s225, %s226
    %p237 = scmp.eq.s32.totalorder %s21, 0
    %p238 = por %p236, %p237
    %p239 = scmp.ne.s32.totalorder %s225, %s226
    %p240 = scmp.eq.s32.totalorder %s22, 1
    %p241 = por %p239, %p240
    %p243 = scmp.ne.s32.totalorder %s226, %s242
    %p244 = scmp.eq.s32.totalorder %s22, 0
    %p245 = por %p243, %p244
    %s246 = ssub.s32 %s23, %s35
    %s247 = ssub.s32 %s24, %s31
    %s248 = sor.u32 %s246, %s247
    %p249 = scmp.eq.s32.totalorder %s248, 0
    %s251 = sadd.s32 %s250, 1
    %s252 = scalar_select %p249, %s250, %s251
    %p255 = pneg %p249
    %p256 = scmp.eq.s32.totalorder %s16, 1
    %p257 = por %p255, %p256
    %p258 = scmp.ne.s32.totalorder %s250, %s253
    %p259 = scmp.eq.s32.totalorder %s16, 0
    %p260 = por %p258, %p259
    %p261 = scmp.ne.s32.totalorder %s250, %s253
    %p262 = scmp.eq.s32.totalorder %s21, 1
    %p263 = por %p261, %p262
    %p264 = scmp.ne.s32.totalorder %s253, %s254
    %p265 = scmp.eq.s32.totalorder %s21, 0
    %p266 = por %p264, %p265
    %p267 = scmp.ne.s32.totalorder %s253, %s254
    %p268 = scmp.eq.s32.totalorder %s22, 1
    %p269 = por %p267, %p268
    %p271 = scmp.ne.s32.totalorder %s254, %s270
    %p272 = scmp.eq.s32.totalorder %s22, 0
    %p273 = por %p271, %p272
    %p274 = scmp.le.s32.totalorder 1, %s16
    %p275 = scmp.lt.s32.totalorder %s16, 3
    %p276 = pnand %p274, %p275
    %p277 = pneg %p276
    // Predicated region
    $region9: #{main_module_forward.1} parent=5 // pred_check
      _
    $region10: #{main_module_forward.1} parent=5 // pred_check_branch
      %279 = sbr.rel (%p276) target = $region12
    $region11: #{main_module_forward.1} parent=5 // pred_region
      %s280 = ssub.s32 %s16, 1
      // Predicated region
      $region13: #{main_module_forward.1} parent=11 // pred_check
        %p281 = pneg %p77
      $region14: #{main_module_forward.1} parent=11 // pred_check_branch
        %283 = sbr.rel (%p281) target = $region16
      $region15: #{main_module_forward.1} parent=11 // pred_region
        _
      $region16: #{main_module_forward.1} parent=11 // pred_fallthru
        _
      // Predicated region
      $region17: #{main_module_forward.1} parent=11 // pred_check
        %p284 = pneg %p98
      $region18: #{main_module_forward.1} parent=11 // pred_check_branch
        %286 = sbr.rel (%p284) target = $region20
      $region19: #{main_module_forward.1} parent=11 // pred_region
        _
      $region20: #{main_module_forward.1} parent=11 // pred_fallthru
        _
      // Predicated region
      $region21: #{main_module_forward.1} parent=11 // pred_check
        %p287 = pneg %p119
      $region22: #{main_module_forward.1} parent=11 // pred_check_branch
        %289 = sbr.rel (%p287) target = $region24
      $region23: #{main_module_forward.1} parent=11 // pred_region
        _
      $region24: #{main_module_forward.1} parent=11 // pred_fallthru
        _
      // Predicated region
      $region25: #{main_module_forward.1} parent=11 // pred_check
        %p290 = pneg %p140
      $region26: #{main_module_forward.1} parent=11 // pred_check_branch
        %292 = sbr.rel (%p290) target = $region28
      $region27: #{main_module_forward.1} parent=11 // pred_region
        _
      $region28: #{main_module_forward.1} parent=11 // pred_fallthru
        _
      // Predicated region
      $region29: #{main_module_forward.1} parent=11 // pred_check
        %p293 = pneg %p161
      $region30: #{main_module_forward.1} parent=11 // pred_check_branch
        %295 = sbr.rel (%p293) target = $region32
      $region31: #{main_module_forward.1} parent=11 // pred_region
        _
      $region32: #{main_module_forward.1} parent=11 // pred_fallthru
        _
      // Predicated region
      $region33: #{main_module_forward.1} parent=11 // pred_check
        %p296 = pneg %p182
      $region34: #{main_module_forward.1} parent=11 // pred_check_branch
        %298 = sbr.rel (%p296) target = $region36
      $region35: #{main_module_forward.1} parent=11 // pred_region
        _
      $region36: #{main_module_forward.1} parent=11 // pred_fallthru
        _
    $region12: #{main_module_forward.1} parent=5 // pred_fallthru
      _
    %p299 = scmp.lt.s32.totalorder %s16, 2
    // Predicated region
    $region37: #{main_module_forward.1} parent=5 // pred_check
      %p300 = pneg %p299
    $region38: #{main_module_forward.1} parent=5 // pred_check_branch
      %302 = sbr.rel (%p300) target = $region40
    $region39: #{main_module_forward.1} parent=5 // pred_region
      // Predicated region
      $region41: #{main_module_forward.1} parent=39 // pred_check
        %p303 = pneg %p50
      $region42: #{main_module_forward.1} parent=39 // pred_check_branch
        %305 = sbr.rel (%p303) target = $region44
      $region43: #{main_module_forward.1} parent=39 // pred_region
        %s306 = smul.u32 2, %s24
        %p307 = scmp.lt.s32.totalorder %s23, 1
        %s308 = scalar_select %p307, %s23, 1
        %p309 = scmp.lt.s32.totalorder %s306, 1
        %s310 = scalar_select %p309, %s306, 1
        %s311 = smul.addr %s308, 2
        %s312 = sadd.s32 %s310, %s311
        %s313 = smul.addr %s312, 4
        %s314 = scalar_lea.vmem %s0, %s313
        %s315 = smul.u32 2, %s24
      $region44: #{main_module_forward.1} parent=39 // pred_fallthru
        _
    $region40: #{main_module_forward.1} parent=5 // pred_fallthru
      _
    %p316 = scmp.le.s32.totalorder 1, %s16
    %p317 = scmp.lt.s32.totalorder %s16, 3
    %p318 = pnand %p316, %p317
    %p319 = pneg %p318
    // Predicated region
    $region45: #{main_module_forward.1} parent=5 // pred_check
      _
    $region46: #{main_module_forward.1} parent=5 // pred_check_branch
      %321 = sbr.rel (%p318) target = $region48
    $region47: #{main_module_forward.1} parent=5 // pred_region
      %s322 = ssub.s32 %s16, 1
      %s323 = smul.u32 2, %s26
      %p324 = scmp.lt.s32.totalorder %s25, 1
      %s325 = scalar_select %p324, %s25, 1
      %p326 = scmp.lt.s32.totalorder %s323, 1
      %s327 = scalar_select %p326, %s323, 1
      %s328 = smul.addr %s325, 2
      %s329 = sadd.s32 %s327, %s328
      %s330 = smul.addr %s329, 4
      %s331 = scalar_lea.vmem %s0, %s330
      %p332 = pneg %p56
      %p333 = pneg %p53
      %p334 = pneg %p77
      %p335 = pneg %p74
      %p336 = pneg %p98
      %p337 = pneg %p95
      %p338 = pneg %p119
      %p339 = pneg %p116
      %p340 = pneg %p140
      %p341 = pneg %p137
      %p342 = pneg %p161
      %p343 = pneg %p158
      %p344 = pneg %p182
      %p345 = pneg %p179
      %p346 = pneg %p210
      %p347 = pneg %p207
      %s348 = smul.u32 2, %s26
      %p349 = scmp.lt.s32.totalorder %s25, 1
      %s350 = scalar_select %p349, %s25, 1
      %p351 = scmp.lt.s32.totalorder %s348, 1
      %s352 = scalar_select %p351, %s348, 1
      %s353 = smul.addr %s350, 2
      %s354 = sadd.s32 %s352, %s353
      %s355 = scalar_lea.vmem %s7, %s354
      %p356 = pneg %p238
      %p357 = pneg %p235
      %s358 = smul.u32 2, %s26
      %p359 = scmp.lt.s32.totalorder %s25, 1
      %s360 = scalar_select %p359, %s25, 1
      %p361 = scmp.lt.s32.totalorder %s358, 1
      %s362 = scalar_select %p361, %s358, 1
      %s363 = smul.addr %s360, 4
      %s364 = sadd.s32 %s362, %s363
      %s365 = smul.addr %s364, 4
      %s366 = scalar_lea.vmem %s8, %s365
      %p367 = pneg %p266
      %p368 = pneg %p263
      %p369 = scmp.lt.s32.totalorder %s25, 1
      %s370 = scalar_select %p369, %s25, 1
      %p371 = scmp.lt.s32.totalorder %s26, 0
      %s372 = scalar_select %p371, %s26, 0
      %s373 = sadd.s32 %s372, %s370
      %s374 = scalar_lea.vmem %s9, %s373
      %s375 = smul.u32 2, %s26
      %p376 = scmp.lt.s32.totalorder %s25, 1
      %s377 = scalar_select %p376, %s25, 1
      %p378 = scmp.lt.s32.totalorder %s375, 1
      %s379 = scalar_select %p378, %s375, 1
      %s380 = smul.addr %s377, 2
      %s381 = sadd.s32 %s379, %s380
      %s382 = smul.addr %s381, 4
      %s383 = scalar_lea.vmem %s0, %s382
      %s384 = smul.u32 2, %s26
      %s385 = smul.u32 2, %s26
      %p386 = scmp.lt.s32.totalorder %s25, 1
      %s387 = scalar_select %p386, %s25, 1
      %p388 = scmp.lt.s32.totalorder %s385, 1
      %s389 = scalar_select %p388, %s385, 1
      %s390 = smul.addr %s387, 2
      %s391 = sadd.s32 %s389, %s390
      %s392 = scalar_lea.vmem %s7, %s391
      %s393 = smul.u32 2, %s26
      %s394 = smul.u32 2, %s26
      %p395 = scmp.lt.s32.totalorder %s25, 1
      %s396 = scalar_select %p395, %s25, 1
      %p397 = scmp.lt.s32.totalorder %s394, 1
      %s398 = scalar_select %p397, %s394, 1
      %s399 = smul.addr %s396, 4
      %s400 = sadd.s32 %s398, %s399
      %s401 = smul.addr %s400, 4
      %s402 = scalar_lea.vmem %s8, %s401
      %s403 = smul.u32 2, %s26
      %p404 = scmp.lt.s32.totalorder %s25, 1
      %s405 = scalar_select %p404, %s25, 1
      %p406 = scmp.lt.s32.totalorder %s26, 0
      %s407 = scalar_select %p406, %s26, 0
      %s408 = sadd.s32 %s407, %s405
      %s409 = scalar_lea.vmem %s9, %s408
      %v410 = vld [vmem:[%s383] sm:$0xff]
      %v411 = vld [vmem:[%s1] sm:$0xff]
      %v412 = vld [vmem:[%s1 + $0x8] sm:$0xff]
      %v413 = vld [vmem:[%s1 + $0x10] sm:$0xff]
      %v414 = vld [vmem:[%s1 + $0x18] sm:$0xff]
      %416 = vset.pattern.permute.xlu0 0
      %417 = vperm.xlu0 %416, %v411
      %v418 = vpop.permute.xlu0 %417
      %421 = vset.pattern.permute.xlu0 0
      %422 = vperm.xlu0 %421, %v412
      %v423 = vpop.permute.xlu0 %422
      %426 = vset.pattern.permute.xlu0 0
      %427 = vperm.xlu0 %426, %v413
      %v428 = vpop.permute.xlu0 %427
      %431 = vset.pattern.permute.xlu0 0
      %432 = vperm.xlu0 %431, %v414
      %v433 = vpop.permute.xlu0 %432
      %v436 = vlaneseq
      %v437 = vshrl.u32 %v436, 7
      %v438 = vsub.s32 0, %v437
      %v439 = vrot.slane %v410, %v438
      %v440 = vlaneseq
      %v441 = vshrl.u32 %v440, 7
      %v442 = vsub.s32 4, %v441
      %v443 = vrot.slane %v410, %v442
      %v446 = vlaneseq
      %v447 = vshrl.u32 %v446, 7
      %v448 = vsub.s32 0, %v447
      %v449 = vrot.slane %v439, %v448
      %v450 = vlaneseq
      %v451 = vshrl.u32 %v450, 7
      %v452 = vsub.s32 0, %v451
      %v453 = vrot.slane %v443, %v452
      %v454 = vmul.f32 %v418, %v449
      %v455 = vmul.f32 %v418, %v453
      %v456 = vmul.f32 %v423, %v449
      %v457 = vmul.f32 %v423, %v453
      %v458 = vmul.f32 %v428, %v449
      %v459 = vmul.f32 %v428, %v453
      %v460 = vmul.f32 %v433, %v449
      %v461 = vmul.f32 %v433, %v453
      %462 = vset.pattern.permute.xlu0 1
      %463 = vperm.xlu0 %462, %v411
      %v464 = vpop.permute.xlu0 %463
      %466 = vset.pattern.permute.xlu0 1
      %467 = vperm.xlu0 %466, %v412
      %v468 = vpop.permute.xlu0 %467
      %470 = vset.pattern.permute.xlu0 1
      %471 = vperm.xlu0 %470, %v413
      %v472 = vpop.permute.xlu0 %471
      %474 = vset.pattern.permute.xlu0 1
      %475 = vperm.xlu0 %474, %v414
      %v476 = vpop.permute.xlu0 %475
      %v478 = vlaneseq
      %v479 = vshrl.u32 %v478, 7
      %v480 = vsub.s32 1, %v479
      %v481 = vrot.slane %v410, %v480
      %v482 = vlaneseq
      %v483 = vshrl.u32 %v482, 7
      %v484 = vsub.s32 5, %v483
      %v485 = vrot.slane %v410, %v484
      %v488 = vlaneseq
      %v489 = vshrl.u32 %v488, 7
      %v490 = vsub.s32 1, %v489
      %v491 = vrot.slane %v481, %v490
      %v492 = vlaneseq
      %v493 = vshrl.u32 %v492, 7
      %v494 = vsub.s32 1, %v493
      %v495 = vrot.slane %v485, %v494
      %v496 = vmul.f32 %v464, %v491
      %v497 = vmul.f32 %v464, %v495
      %v498 = vmul.f32 %v468, %v491
      %v499 = vmul.f32 %v468, %v495
      %v500 = vmul.f32 %v472, %v491
      %v501 = vmul.f32 %v472, %v495
      %v502 = vmul.f32 %v476, %v491
      %v503 = vmul.f32 %v476, %v495
      %v504 = vadd.f32 %v454, %v496
      %v505 = vadd.f32 %v455, %v497
      %v506 = vadd.f32 %v456, %v498
      %v507 = vadd.f32 %v457, %v499
      %v508 = vadd.f32 %v458, %v500
      %v509 = vadd.f32 %v459, %v501
      %v510 = vadd.f32 %v460, %v502
      %v511 = vadd.f32 %v461, %v503
      %512 = vset.pattern.permute.xlu0 2
      %513 = vperm.xlu0 %512, %v411
      %v514 = vpop.permute.xlu0 %513
      %516 = vset.pattern.permute.xlu0 2
      %517 = vperm.xlu0 %516, %v412
      %v518 = vpop.permute.xlu0 %517
      %520 = vset.pattern.permute.xlu0 2
      %521 = vperm.xlu0 %520, %v413
      %v522 = vpop.permute.xlu0 %521
      %524 = vset.pattern.permute.xlu0 2
      %525 = vperm.xlu0 %524, %v414
      %v526 = vpop.permute.xlu0 %525
      %v528 = vlaneseq
      %v529 = vshrl.u32 %v528, 7
      %v530 = vsub.s32 2, %v529
      %v531 = vrot.slane %v410, %v530
      %v532 = vlaneseq
      %v533 = vshrl.u32 %v532, 7
      %v534 = vsub.s32 6, %v533
      %v535 = vrot.slane %v410, %v534
      %v538 = vlaneseq
      %v539 = vshrl.u32 %v538, 7
      %v540 = vsub.s32 2, %v539
      %v541 = vrot.slane %v531, %v540
      %v542 = vlaneseq
      %v543 = vshrl.u32 %v542, 7
      %v544 = vsub.s32 2, %v543
      %v545 = vrot.slane %v535, %v544
      %v546 = vmul.f32 %v514, %v541
      %v547 = vmul.f32 %v514, %v545
      %v548 = vmul.f32 %v518, %v541
      %v549 = vmul.f32 %v518, %v545
      %v550 = vmul.f32 %v522, %v541
      %v551 = vmul.f32 %v522, %v545
      %v552 = vmul.f32 %v526, %v541
      %v553 = vmul.f32 %v526, %v545
      %v554 = vadd.f32 %v504, %v546
      %v555 = vadd.f32 %v505, %v547
      %v556 = vadd.f32 %v506, %v548
      %v557 = vadd.f32 %v507, %v549
      %v558 = vadd.f32 %v508, %v550
      %v559 = vadd.f32 %v509, %v551
      %v560 = vadd.f32 %v510, %v552
      %v561 = vadd.f32 %v511, %v553
      %562 = vset.pattern.permute.xlu0 3
      %563 = vperm.xlu0 %562, %v411
      %v564 = vpop.permute.xlu0 %563
      %566 = vset.pattern.permute.xlu0 3
      %567 = vperm.xlu0 %566, %v412
      %v568 = vpop.permute.xlu0 %567
      %570 = vset.pattern.permute.xlu0 3
      %571 = vperm.xlu0 %570, %v413
      %v572 = vpop.permute.xlu0 %571
      %574 = vset.pattern.permute.xlu0 3
      %575 = vperm.xlu0 %574, %v414
      %v576 = vpop.permute.xlu0 %575
      %v578 = vlaneseq
      %v579 = vshrl.u32 %v578, 7
      %v580 = vsub.s32 3, %v579
      %v581 = vrot.slane %v410, %v580
      %v582 = vlaneseq
      %v583 = vshrl.u32 %v582, 7
      %v584 = vsub.s32 7, %v583
      %v585 = vrot.slane %v410, %v584
      %v588 = vlaneseq
      %v589 = vshrl.u32 %v588, 7
      %v590 = vsub.s32 3, %v589
      %v591 = vrot.slane %v581, %v590
      %v592 = vlaneseq
      %v593 = vshrl.u32 %v592, 7
      %v594 = vsub.s32 3, %v593
      %v595 = vrot.slane %v585, %v594
      %v596 = vmul.f32 %v564, %v591
      %v597 = vmul.f32 %v564, %v595
      %v598 = vmul.f32 %v568, %v591
      %v599 = vmul.f32 %v568, %v595
      %v600 = vmul.f32 %v572, %v591
      %v601 = vmul.f32 %v572, %v595
      %v602 = vmul.f32 %v576, %v591
      %v603 = vmul.f32 %v576, %v595
      %v604 = vadd.f32 %v554, %v596
      %v605 = vadd.f32 %v555, %v597
      %v606 = vadd.f32 %v556, %v598
      %v607 = vadd.f32 %v557, %v599
      %v608 = vadd.f32 %v558, %v600
      %v609 = vadd.f32 %v559, %v601
      %v610 = vadd.f32 %v560, %v602
      %v611 = vadd.f32 %v561, %v603
      %v612 = vld [vmem:[%s2] sm:$0xff]
      %v613 = vld [vmem:[%s2 + $0x8] sm:$0xff]
      %v614 = vld [vmem:[%s2 + $0x10] sm:$0xff]
      %v615 = vld [vmem:[%s2 + $0x18] sm:$0xff]
      %617 = vset.pattern.permute.xlu0 0
      %618 = vperm.xlu0 %617, %v612
      %v619 = vpop.permute.xlu0 %618
      %622 = vset.pattern.permute.xlu0 0
      %623 = vperm.xlu0 %622, %v613
      %v624 = vpop.permute.xlu0 %623
      %627 = vset.pattern.permute.xlu0 0
      %628 = vperm.xlu0 %627, %v614
      %v629 = vpop.permute.xlu0 %628
      %632 = vset.pattern.permute.xlu0 0
      %633 = vperm.xlu0 %632, %v615
      %v634 = vpop.permute.xlu0 %633
      %v636 = vadd.f32 %v604, %v619
      %v637 = vadd.f32 %v605, %v619
      %v638 = vadd.f32 %v606, %v624
      %v639 = vadd.f32 %v607, %v624
      %v640 = vadd.f32 %v608, %v629
      %v641 = vadd.f32 %v609, %v629
      %v642 = vadd.f32 %v610, %v634
      %v643 = vadd.f32 %v611, %v634
      %v644 = vmax.f32 %v636, 0.0
      %v645 = vmax.f32 %v637, 0.0
      %v646 = vmax.f32 %v638, 0.0
      %v647 = vmax.f32 %v639, 0.0
      %v648 = vmax.f32 %v640, 0.0
      %v649 = vmax.f32 %v641, 0.0
      %v650 = vmax.f32 %v642, 0.0
      %v651 = vmax.f32 %v643, 0.0
      %v652 = vld [vmem:[%s4] sm:$0x3]
      %v653 = vld [vmem:[%s6] sm:$0xff]
      %v654 = vld [vmem:[%s6 + $0x8] sm:$0x3f]
      %v655 = vld [vmem:[%s3] sm:$0x3]
      %657 = vset.pattern.permute.xlu0 0
      %658 = vperm.xlu0 %657, %v652
      %v659 = vpop.permute.xlu0 %658
      %vm661 = vcmask 261120
      %v663 = vsel %vm661, %v655, 0
      %665 = vmatprep.subr.mxu0 %v645
      %666 = vmatpush1.msra.mxu0 %v644
      %667 = vmatprep.subr.mxu0 %v647
      %668 = vmatpush1.msra.mxu0 %v646
      %669 = vmatprep.subr.mxu0 %v649
      %670 = vmatpush1.msra.mxu0 %v648
      %671 = vmatprep.subr.mxu0 %v651
      %672 = vmatpush1.msra.mxu0 %v650
      %673 = vmatprep.subr.mxu0 0.0
      %674 = vmatpush1.msra.mxu0 0.0
      %675 = vmatprep.subr.mxu0 0.0
      %676 = vmatpush1.msra.mxu0 0.0
      %677 = vmatprep.subr.mxu0 0.0
      %678 = vmatpush1.msra.mxu0 0.0
      %679 = vmatprep.subr.mxu0 0.0
      %680 = vmatpush1.msra.mxu0 0.0
      %681 = vmatprep.subr.mxu0 0.0
      %682 = vmatpush1.msra.mxu0 0.0
      %683 = vmatprep.subr.mxu0 0.0
      %684 = vmatpush1.msra.mxu0 0.0
      %685 = vmatprep.subr.mxu0 0.0
      %686 = vmatpush1.msra.mxu0 0.0
      %687 = vmatprep.subr.mxu0 0.0
      %688 = vmatpush1.msra.mxu0 0.0
      %689 = vmatprep.subr.mxu0 0.0
      %690 = vmatpush1.msra.mxu0 0.0
      %691 = vmatprep.subr.mxu0 0.0
      %692 = vmatpush1.msra.mxu0 0.0
      %693 = vmatprep.subr.mxu0 0.0
      %694 = vmatpush1.msra.mxu0 0.0
      %695 = vmatprep.subr.mxu0 0.0
      %696 = vmatpush1.msra.mxu0 0.0
      %697 = vmatprep.subr.mxu0 0.0
      %698 = vmatpush1.msra.mxu0 0.0
      %699 = vmatprep.subr.mxu0 0.0
      %700 = vmatpush1.msra.mxu0 0.0
      %701 = vmatprep.subr.mxu0 0.0
      %702 = vmatpush1.msra.mxu0 0.0
      %703 = vmatprep.subr.mxu0 0.0
      %704 = vmatpush1.msra.mxu0 0.0
      %705 = vmatprep.subr.mxu0 0.0
      %706 = vmatpush1.msra.mxu0 0.0
      %707 = vmatprep.subr.mxu0 0.0
      %708 = vmatpush1.msra.mxu0 0.0
      %709 = vmatprep.subr.mxu0 0.0
      %710 = vmatpush1.msra.mxu0 0.0
      %711 = vmatprep.subr.mxu0 0.0
      %712 = vmatpush1.msra.mxu0 0.0
      %713 = vmatprep.subr.mxu0 0.0
      %714 = vmatpush1.msra.mxu0 0.0
      %715 = vmatprep.subr.mxu0 0.0
      %716 = vmatpush1.msra.mxu0 0.0
      %717 = vmatprep.subr.mxu0 0.0
      %718 = vmatpush1.msra.mxu0 0.0
      %719 = vmatprep.subr.mxu0 0.0
      %720 = vmatpush1.msra.mxu0 0.0
      %721 = vmatprep.subr.mxu0 0.0
      %722 = vmatpush1.msra.mxu0 0.0
      %723 = vmatprep.subr.mxu0 0.0
      %724 = vmatpush1.msra.mxu0 0.0
      %725 = vmatprep.subr.mxu0 0.0
      %726 = vmatpush1.msra.mxu0 0.0
      %727 = vmatprep.subr.mxu0 0.0
      %728 = vmatpush1.msra.mxu0 0.0
      %729 = vmatprep.mubr.f32.mxu0 0.0
      %730 = vmatmul.mubr.f32.gmra.mrb[0].mxu0 %v663
      %v731 = vpop.f32.mrb[0].mxu0
      %v732 = vadd.f32 %v659, %v731
      %v733 = vpop.f32.mrb[0].mxu0
      %v734 = vadd.f32 %v659, %v733
      %735 = vdwg.mxu0
      %v736 = vld [vmem:[%s5] sm:$0xff]
      %v737 = vld [vmem:[%s5 + $0x8] sm:$0x3f]
      %739 = vset.pattern.permute.xlu0 0
      %740 = vperm.xlu0 %739, %v653
      %v741 = vpop.permute.xlu0 %740
      %744 = vset.pattern.permute.xlu0 0
      %745 = vperm.xlu0 %744, %v654
      %v746 = vpop.permute.xlu0 %745
      %v749 = vsel %vm661, %v736, 0
      %v752 = vsel %vm661, %v737, 0
      %754 = vmatprep.subr.mxu0 %v645
      %755 = vmatpush1.msra.mxu0 %v644
      %756 = vmatprep.subr.mxu0 %v647
      %757 = vmatpush1.msra.mxu0 %v646
      %758 = vmatprep.subr.mxu0 %v649
      %759 = vmatpush1.msra.mxu0 %v648
      %760 = vmatprep.subr.mxu0 %v651
      %761 = vmatpush1.msra.mxu0 %v650
      %762 = vmatprep.subr.mxu0 0.0
      %763 = vmatpush1.msra.mxu0 0.0
      %764 = vmatprep.subr.mxu0 0.0
      %765 = vmatpush1.msra.mxu0 0.0
      %766 = vmatprep.subr.mxu0 0.0
      %767 = vmatpush1.msra.mxu0 0.0
      %768 = vmatprep.subr.mxu0 0.0
      %769 = vmatpush1.msra.mxu0 0.0
      %770 = vmatprep.subr.mxu0 0.0
      %771 = vmatpush1.msra.mxu0 0.0
      %772 = vmatprep.subr.mxu0 0.0
      %773 = vmatpush1.msra.mxu0 0.0
      %774 = vmatprep.subr.mxu0 0.0
      %775 = vmatpush1.msra.mxu0 0.0
      %776 = vmatprep.subr.mxu0 0.0
      %777 = vmatpush1.msra.mxu0 0.0
      %778 = vmatprep.subr.mxu0 0.0
      %779 = vmatpush1.msra.mxu0 0.0
      %780 = vmatprep.subr.mxu0 0.0
      %781 = vmatpush1.msra.mxu0 0.0
      %782 = vmatprep.subr.mxu0 0.0
      %783 = vmatpush1.msra.mxu0 0.0
      %784 = vmatprep.subr.mxu0 0.0
      %785 = vmatpush1.msra.mxu0 0.0
      %786 = vmatprep.subr.mxu0 0.0
      %787 = vmatpush1.msra.mxu0 0.0
      %788 = vmatprep.subr.mxu0 0.0
      %789 = vmatpush1.msra.mxu0 0.0
      %790 = vmatprep.subr.mxu0 0.0
      %791 = vmatpush1.msra.mxu0 0.0
      %792 = vmatprep.subr.mxu0 0.0
      %793 = vmatpush1.msra.mxu0 0.0
      %794 = vmatprep.subr.mxu0 0.0
      %795 = vmatpush1.msra.mxu0 0.0
      %796 = vmatprep.subr.mxu0 0.0
      %797 = vmatpush1.msra.mxu0 0.0
      %798 = vmatprep.subr.mxu0 0.0
      %799 = vmatpush1.msra.mxu0 0.0
      %800 = vmatprep.subr.mxu0 0.0
      %801 = vmatpush1.msra.mxu0 0.0
      %802 = vmatprep.subr.mxu0 0.0
      %803 = vmatpush1.msra.mxu0 0.0
      %804 = vmatprep.subr.mxu0 0.0
      %805 = vmatpush1.msra.mxu0 0.0
      %806 = vmatprep.subr.mxu0 0.0
      %807 = vmatpush1.msra.mxu0 0.0
      %808 = vmatprep.subr.mxu0 0.0
      %809 = vmatpush1.msra.mxu0 0.0
      %810 = vmatprep.subr.mxu0 0.0
      %811 = vmatpush1.msra.mxu0 0.0
      %812 = vmatprep.subr.mxu0 0.0
      %813 = vmatpush1.msra.mxu0 0.0
      %814 = vmatprep.subr.mxu0 0.0
      %815 = vmatpush1.msra.mxu0 0.0
      %816 = vmatprep.subr.mxu0 0.0
      %817 = vmatpush1.msra.mxu0 0.0
      %818 = vmatprep.mubr.f32.mxu0 0.0
      %819 = vmatmul.mubr.f32.gmra.mrb[0].mxu0 %v749
      %v820 = vpop.f32.mrb[0].mxu0
      %v821 = vadd.f32 %v741, %v820
      %v822 = vpop.f32.mrb[0].mxu0
      %v823 = vadd.f32 %v741, %v822
      %824 = vmatprep.mubr.f32.mxu0 0.0
      %825 = vmatmul.mubr.f32.gmra.mrb[0].mxu0 %v752
      %v826 = vpop.f32.mrb[0].mxu0
      %v827 = vadd.f32 %v746, %v826
      %v828 = vpop.f32.mrb[0].mxu0
      %v829 = vadd.f32 %v746, %v828
      %830 = vdwg.mxu0
      %vm831 = vcmask 1041408
      %v832 = vsel %vm831, %v732, -inf
      %v833 = vrot.slane %v832, 4
      %v834 = vmax.f32 %v832, %v833
      %v835 = vrot.slane %v834, 2
      %v836 = vmax.f32 %v834, %v835
      %v837 = vrot.slane %v836, 1
      %v838 = vmax.f32 %v836, %v837
      %v839 = vsel %vm831, %v734, -inf
      %v840 = vrot.slane %v839, 4
      %v841 = vmax.f32 %v839, %v840
      %v842 = vrot.slane %v841, 2
      %v843 = vmax.f32 %v841, %v842
      %v844 = vrot.slane %v843, 1
      %v845 = vmax.f32 %v843, %v844
      %v846 = vxor.u32 %v838, 2147483648
      %v847 = vxor.u32 %v845, 2147483648
      %v848 = vmul.f32 %v846, 1.442695
      %v849 = vpow.pop %v848
      %v850 = vmul.f32 %v847, 1.442695
      %v851 = vpow.pop %v850
      %v852 = vadd.f32 %v849, 1.0
      %v853 = vadd.f32 %v851, 1.0
      %v854 = vrcp.pop %v852
      %v855 = vmul.f32 1.0, %v854
      %v856 = vrcp.pop %v853
      %v857 = vmul.f32 1.0, %v856
      %v858 = vsub.f32 %v732, %v659
      %v859 = vsub.f32 %v734, %v659
      %v860 = vmul.f32 %v855, %v858
      %v861 = vmul.f32 %v857, %v859
      %v862 = vadd.f32 %v860, %v659
      %v863 = vadd.f32 %v861, %v659
      %v864 = vpack.c.bf16 %v862, %v862
      %v865 = vpack.c.bf16 %v863, %v863
      %v868 = vcombine.low %v864, %v865
      %v870 = vunpack.c.l.s4 1966171168
      %v871 = vunpack.c.0.s8 %v870
      %v872 = vlaneseq
      %v873 = vshrl.u32 %v872, 7
      %v874 = vsub.s32 %v871, %v873
      %v875 = vrot.slane %v868, %v874
      %v877 = vunpack.c.l.s4 1966171168
      %v878 = vunpack.c.0.s8 %v877
      %v879 = vlaneseq
      %v880 = vshrl.u32 %v879, 7
      %v881 = vsub.s32 %v878, %v880
      %v882 = vrot.slane %v875, %v881
      %884 = vst [vmem:[%s392] sm:$0x3] %v882
      %v885 = vsub.f32 %v821, %v741
      %v886 = vsub.f32 %v823, %v741
      %v887 = vsub.f32 %v827, %v746
      %v888 = vsub.f32 %v829, %v746
      %v889 = vmul.f32 %v855, %v885
      %v890 = vmul.f32 %v857, %v886
      %v891 = vmul.f32 %v855, %v887
      %v892 = vmul.f32 %v857, %v888
      %v893 = vadd.f32 %v889, %v741
      %v894 = vadd.f32 %v890, %v741
      %v895 = vadd.f32 %v891, %v746
      %v896 = vadd.f32 %v892, %v746
      %v897 = vpack.c.bf16 %v895, %v893
      %v898 = vpack.c.bf16 %v896, %v894
      %v901 = vunpack.c.l.b16 %v897
      %v902 = vunpack.c.l.b16 %v898
      %v903 = vunpack.c.h.b16 %v897
      %v904 = vunpack.c.h.b16 %v898
      %v905 = vpack.c.b16 %v902, %v901
      %v906 = vpack.c.b16 %v904, %v903
      %909 = vst [vmem:[%s402] sm:$0xff] %v905
      %910 = vst [vmem:[%s402 + $0x8] sm:$0x77] %v906
      %vm911 = vcmask 1040384
      %v912 = vsel %vm911, %v855, 0.0
      %v913 = vsel %vm911, %v857, 0.0
      %v914 = vadd.f32 %v912, %v913
      %915 = vadd.xlane.f32.xlu0 %v914
      %v916 = vpop.xlane.xlu0 %915
      %v917 = vrot.slane %v916, 4
      %v918 = vadd.f32 %v916, %v917
      %v919 = vrot.slane %v918, 2
      %v920 = vadd.f32 %v918, %v919
      %v921 = vrot.slane %v920, 1
      %v922 = vadd.f32 %v920, %v921
      %s923 = vtos %v922
      %v924 = vstv %s923
      %925 = vst [vmem:[%s409] sm:$0x1] %v924
      %s926 = smul.u32 2, %s26
      %p927 = scmp.lt.s32.totalorder %s25, 1
      %s928 = scalar_select %p927, %s25, 1
      %p929 = scmp.lt.s32.totalorder %s926, 1
      %s930 = scalar_select %p929, %s926, 1
      %s931 = smul.addr %s928, 2
      %s932 = sadd.s32 %s930, %s931
      %s933 = scalar_lea.vmem %s7, %s932
      %s934 = smul.u32 2, %s26
      %p935 = scmp.lt.s32.totalorder %s25, 1
      %s936 = scalar_select %p935, %s25, 1
      %p937 = scmp.lt.s32.totalorder %s934, 1
      %s938 = scalar_select %p937, %s934, 1
      %s939 = smul.addr %s936, 4
      %s940 = sadd.s32 %s938, %s939
      %s941 = smul.addr %s940, 4
      %s942 = scalar_lea.vmem %s8, %s941
      %p943 = scmp.lt.s32.totalorder %s25, 1
      %s944 = scalar_select %p943, %s25, 1
      %p945 = scmp.lt.s32.totalorder %s26, 0
      %s946 = scalar_select %p945, %s26, 0
      %s947 = sadd.s32 %s946, %s944
      %s948 = scalar_lea.vmem %s9, %s947
      // Predicated region
      $region49: #{main_module_forward.1} parent=47 // pred_check
        %p949 = pneg %p207
      $region50: #{main_module_forward.1} parent=47 // pred_check_branch
        %951 = sbr.rel (%p949) target = $region52
      $region51: #{main_module_forward.1} parent=47 // pred_region
        %s952 = smul.u32 2, %s26
      $region52: #{main_module_forward.1} parent=47 // pred_fallthru
        _
      // Predicated region
      $region53: #{main_module_forward.1} parent=47 // pred_check
        %p953 = pneg %p235
      $region54: #{main_module_forward.1} parent=47 // pred_check_branch
        %955 = sbr.rel (%p953) target = $region56
      $region55: #{main_module_forward.1} parent=47 // pred_region
        %s956 = smul.u32 2, %s26
      $region56: #{main_module_forward.1} parent=47 // pred_fallthru
        _
      // Predicated region
      $region57: #{main_module_forward.1} parent=47 // pred_check
        %p957 = pneg %p263
      $region58: #{main_module_forward.1} parent=47 // pred_check_branch
        %959 = sbr.rel (%p957) target = $region60
      $region59: #{main_module_forward.1} parent=47 // pred_region
        _
      $region60: #{main_module_forward.1} parent=47 // pred_fallthru
        _
    $region48: #{main_module_forward.1} parent=5 // pred_fallthru
      _
    %p960 = scmp.le.s32.totalorder 2, %s16
    // Predicated region
    $region61: #{main_module_forward.1} parent=5 // pred_check
      %p961 = pneg %p960
    $region62: #{main_module_forward.1} parent=5 // pred_check_branch
      %963 = sbr.rel (%p961) target = $region64
    $region63: #{main_module_forward.1} parent=5 // pred_region
      %s964 = ssub.s32 %s16, 2
      // Predicated region
      $region65: #{main_module_forward.1} parent=63 // pred_check
        %p965 = pneg %p213
      $region66: #{main_module_forward.1} parent=63 // pred_check_branch
        %967 = sbr.rel (%p965) target = $region68
      $region67: #{main_module_forward.1} parent=63 // pred_region
        %s968 = smul.u32 2, %s28
        %p969 = scmp.lt.s32.totalorder %s27, 1
        %s970 = scalar_select %p969, %s27, 1
        %p971 = scmp.lt.s32.totalorder %s968, 1
        %s972 = scalar_select %p971, %s968, 1
        %s973 = smul.addr %s970, 2
        %s974 = sadd.s32 %s972, %s973
        %s975 = scalar_lea.vmem %s7, %s974
      $region68: #{main_module_forward.1} parent=63 // pred_fallthru
        _
      // Predicated region
      $region69: #{main_module_forward.1} parent=63 // pred_check
        %p976 = pneg %p241
      $region70: #{main_module_forward.1} parent=63 // pred_check_branch
        %978 = sbr.rel (%p976) target = $region72
      $region71: #{main_module_forward.1} parent=63 // pred_region
        %s979 = smul.u32 2, %s28
        %p980 = scmp.lt.s32.totalorder %s27, 1
        %s981 = scalar_select %p980, %s27, 1
        %p982 = scmp.lt.s32.totalorder %s979, 1
        %s983 = scalar_select %p982, %s979, 1
        %s984 = smul.addr %s981, 4
        %s985 = sadd.s32 %s983, %s984
        %s986 = smul.addr %s985, 4
        %s987 = scalar_lea.vmem %s8, %s986
      $region72: #{main_module_forward.1} parent=63 // pred_fallthru
        _
      // Predicated region
      $region73: #{main_module_forward.1} parent=63 // pred_check
        %p988 = pneg %p269
      $region74: #{main_module_forward.1} parent=63 // pred_check_branch
        %990 = sbr.rel (%p988) target = $region76
      $region75: #{main_module_forward.1} parent=63 // pred_region
        %p991 = scmp.lt.s32.totalorder %s27, 1
        %s992 = scalar_select %p991, %s27, 1
        %p993 = scmp.lt.s32.totalorder %s28, 0
        %s994 = scalar_select %p993, %s28, 0
        %s995 = sadd.s32 %s994, %s992
        %s996 = scalar_lea.vmem %s9, %s995
      $region76: #{main_module_forward.1} parent=63 // pred_fallthru
        _
    $region64: #{main_module_forward.1} parent=5 // pred_fallthru
      _
  $region6: #{main_module_forward.1} parent=0 // loop_footer
    %s20 = sadd.s32 1, %s16
  $region7: #{main_module_forward.1} parent=0 // loop_footer_branch
    %15 = sbr.rel target = $region3
  $region8: #{main_module_forward.1} parent=0 // loop_exit
    _

</llo_original>
